<compile_context>
chip_gen: v6e
topology: v6e:2x2x1
jax: 0.10.0
libtpu: 0.0.40
codegen_flags: <defaults>
</compile_context>

<pallas_src>
import functools

import jax
import jax.numpy as jnp
from jax.experimental import pallas as pl
from jax.experimental.pallas import tpu as pltpu

_LANE = 128
# Conservative per-kernel tile budget: fits v7x's 64 MiB physical VMEM with
# headroom for Mosaic internal scratch; trivially fits v5e/v6e (128 MiB).
_VMEM_TILE_BUDGET = 32 * 1024 * 1024
# Raise the scoped VMEM limit (v5e default is only 16 MiB) but stay well
# under v7x's 64 MiB physical capacity.
_VMEM_LIMIT_BYTES = 48 * 1024 * 1024


# --------------------------------------------------------------------------
# Kernels
# --------------------------------------------------------------------------
def _linear_kernel_acc(x_ref, wt_ref, b_ref, o_ref, acc_ref):
    """General path (output dtype != f32): f32 VMEM accumulator scratch."""
    k = pl.program_id(2)

    @pl.when(k == 0)
    def _init():
        acc_ref[...] = jnp.zeros_like(acc_ref)

    acc_ref[...] += jnp.dot(
        x_ref[...], wt_ref[...], preferred_element_type=jnp.float32
    )

    @pl.when(k == pl.num_programs(2) - 1)
    def _finalize():
        # Bias add + cast + HBM writeback happen exactly once per output tile.
        o_ref[...] = (acc_ref[...] + b_ref[...]).astype(o_ref.dtype)


def _linear_kernel_f32(x_ref, wt_ref, b_ref, o_ref):
    """f32-output path: accumulate directly into the K-resident output tile
    (its index_map ignores k), saving tm*tn*4 bytes of VMEM and a tile copy."""
    k = pl.program_id(2)

    @pl.when(k == 0)
    def _init():
        o_ref[...] = jnp.broadcast_to(b_ref[...], o_ref.shape)

    o_ref[...] += jnp.dot(
        x_ref[...], wt_ref[...], preferred_element_type=jnp.float32
    )


# --------------------------------------------------------------------------
# Tile policy helpers
# --------------------------------------------------------------------------
def _round_up(a: int, b: int) -> int:
    return -(-a // b) * b


def _sublane_granularity(dtype) -> int:
    # Sub-32-bit dtypes pack along sublanes: bf16 -> 16, int8/fp8 -> 32.
    return {4: 8, 2: 16, 1: 32}.get(jnp.dtype(dtype).itemsize, 8)


def _pick_tile(dim: int, cap: int, granule: int) -> int:
    """Tile = multiple of `granule`, <= cap.  Padding-aware: among candidates
    whose padded extent is within 12.5% of the minimum, take the largest."""
    dim_r = _round_up(max(int(dim), 1), granule)
    if dim_r <= cap:
        return dim_r  # single tile along this axis
    candidates = list(range(granule, cap + 1, granule))
    padded = {t: _round_up(dim_r, t) for t in candidates}
    best = min(padded.values())
    return max(t for t in candidates if padded[t] <= best * 1.125)


# --------------------------------------------------------------------------
# One-time parameter preparation (layout plumbing hoisted out of forward)
# --------------------------------------------------------------------------
def init_mlp_params(weight, bias, *, compute_dtype=None, batch_hint=None):
    """Transpose the (N, K) torch weight to (K, N) and pad to tile multiples
    ONCE, so the forward pass never re-reads / re-writes the weight for
    layout. Returns a params dict consumed by `mlp_forward`.

    compute_dtype: optionally store the weight in bf16 (v6e/v7x MXU runs bf16
    at full rate and HBM traffic halves); accumulation stays f32 either way.
    """
    N, K = weight.shape
    assert bias.shape == (N,), "bias shape mismatch"
    w_dtype = jnp.dtype(compute_dtype) if compute_dtype is not None else weight.dtype
    w_bytes = jnp.dtype(w_dtype).itemsize

    # tk / tn do not depend on the batch.  Caps per review: tk<=2048, tn<=512.
    tk = _pick_tile(K, 2048, _LANE)
    tn = _pick_tile(N, 512, _LANE)

    # v7x megacore: when the batch is expected to be a single M tile, make
    # sure the N axis splits into >= 2 "parallel" tiles so both TensorCores
    # get work (no-op on v5e/v6e single-TC chips).
    if batch_hint is None or batch_hint <= 512:
        n_r = _round_up(N, _LANE)
        if n_r >= 2 * _LANE and _round_up(N, tn) // tn < 2:
            tn = max(_LANE, (n_r // 2 // _LANE) * _LANE)

    # Keep the double-buffered weight tile well inside half the budget.
    while 2 * tk * tn * w_bytes > _VMEM_TILE_BUDGET // 2 and tk > _LANE:
        tk = max(_LANE, (tk // 2 // _LANE) * _LANE)

    Kp, Np = _round_up(K, tk), _round_up(N, tn)

    w_kn = weight.T.astype(w_dtype)                      # (K, N) for the MXU
    if (Kp, Np) != (K, N):
        w_kn = jnp.pad(w_kn, ((0, Kp - K), (0, Np - N)))
    b_row = bias.astype(jnp.float32)
    if Np != N:
        b_row = jnp.pad(b_row, (0, Np - N))
    b_row = b_row.reshape(1, Np)

    return {"w_kn": w_kn, "b_row": b_row, "n": N, "k": K, "tn": tn, "tk": tk}


# --------------------------------------------------------------------------
# Forward
# --------------------------------------------------------------------------
@functools.partial(jax.jit, static_argnames=("n", "k", "tn", "tk"))
def _linear_pallas(x, w_kn, b_row, *, n, k, tn, tk):
    B, K = x.shape
    assert K == k, "in_features mismatch"
    Kp, Np = w_kn.shape

    out_dtype = x.dtype
    in_bytes = jnp.dtype(x.dtype).itemsize
    w_bytes = jnp.dtype(w_kn.dtype).itemsize
    out_bytes = jnp.dtype(out_dtype).itemsize
    use_scratch = out_dtype != jnp.float32

    # Dtype-aware sublane rounding for the M tile.
    sub = _sublane_granularity(x.dtype)
    tm = _pick_tile(B, 512, sub)

    # Shrink tm until the double-buffered footprint fits the VMEM budget.
    def footprint(tm_):
        f = 2 * tm_ * tk * in_bytes       # x tiles (double-buffered)
        f += 2 * tk * tn * w_bytes        # W^T tiles
        f += 2 * tm_ * tn * out_bytes     # output tiles
        if use_scratch:
            f += tm_ * tn * 4             # f32 accumulator scratch
        return f

    while footprint(tm) > _VMEM_TILE_BUDGET and tm > sub:
        tm = max(sub, (tm // 2 // sub) * sub)

    Mp = _round_up(B, tm)
    x_p = x
    if (Mp, Kp) != (B, K):
        x_p = jnp.pad(x, ((0, Mp - B), (0, Kp - K)))

    m_steps, n_steps, k_steps = Mp // tm, Np // tn, Kp // tk
    grid = (m_steps, n_steps, k_steps)   # reduction axis (K) last

    # GEMV / small-batch regime: deeper weight buffering hides DMA issue
    # latency when each compute step is tiny and the weight streams once.
    if m_steps == 1 and k_steps >= 3 and B <= 64:
        w_spec = pl.BlockSpec((tk, tn), lambda i, j, kk: (kk, j),
                              pipeline_mode=pl.Buffered(3))
    else:
        w_spec = pl.BlockSpec((tk, tn), lambda i, j, kk: (kk, j))

    kernel = _linear_kernel_acc if use_scratch else _linear_kernel_f32
    scratch = [pltpu.VMEM((tm, tn), jnp.float32)] if use_scratch else []

    cost = pl.CostEstimate(
        flops=2 * Mp * Np * Kp,
        transcendentals=0,
        bytes_accessed=(Mp * Kp * in_bytes * n_steps     # x re-read per N tile
                        + Kp * Np * w_bytes * m_steps    # W re-read per M tile
                        + Mp * Np * out_bytes),          # single writeback
    )

    out_p = pl.pallas_call(
        kernel,
        out_shape=jax.ShapeDtypeStruct((Mp, Np), out_dtype),
        grid_spec=pltpu.PrefetchScalarGridSpec(
            num_scalar_prefetch=0,
            grid=grid,
            in_specs=[
                pl.BlockSpec((tm, tk), lambda i, j, kk: (i, kk)),  # x tile
                w_spec,                                            # W^T tile
                pl.BlockSpec((1, tn), lambda i, j, kk: (0, j)),    # bias tile
            ],
            out_specs=pl.BlockSpec((tm, tn), lambda i, j, kk: (i, j)),
            scratch_shapes=scratch,
        ),
        compiler_params=pltpu.CompilerParams(
            dimension_semantics=("parallel", "parallel", "arbitrary"),
            vmem_limit_bytes=_VMEM_LIMIT_BYTES,
        ),
        cost_estimate=cost,
    )(x_p, w_kn, b_row)

    if (Mp, Np) != (B, n):
        out_p = out_p[:B, :n]
    return out_p


def mlp_forward(params, x):
    """y = x @ W^T + b with torch.nn.Linear semantics, on any leading dims."""
    lead = x.shape[:-1]
    y2 = _linear_pallas(
        x.reshape(-1, x.shape[-1]),
        params["w_kn"], params["b_row"],
        n=params["n"], k=params["k"], tn=params["tn"], tk=params["tk"],
    )
    return y2.reshape(*lead, params["n"])


# --------------------------------------------------------------------------
# Demo / self-test
# --------------------------------------------------------------------------
if __name__ == "__main__":
    # config = {'input_size': 32, 'output_size': 64}, batch = 8
    # NOTE: at this toy size launch overhead dominates; the tile policy and
    # one-time weight layout pay off at real Linear shapes.
    batch, input_size, output_size = 8, 32, 64

    key = jax.random.PRNGKey(0)
    kx, kw, kb = jax.random.split(key, 3)

    x = jax.random.normal(kx, (batch, input_size), dtype=jnp.float32)
    # Deterministic init mimicking nn.Linear's uniform(-1/sqrt(K), 1/sqrt(K))
    bound = 1.0 / (input_size ** 0.5)
    weight = jax.random.uniform(
        kw, (output_size, input_size), dtype=jnp.float32,
        minval=-bound, maxval=bound)
    bias = jax.random.uniform(
        kb, (output_size,), dtype=jnp.float32, minval=-bound, maxval=bound)

    # One-time layout plumbing (transpose + pad), outside the forward path.
    params = init_mlp_params(weight, bias, batch_hint=batch)

    y = mlp_forward(params, x)
    jax.block_until_ready(y)

    # Sanity check against plain-JAX reference.
    y_ref = x @ weight.T + bias
    assert y.shape == y_ref.shape, "shape mismatch vs reference"
    assert jnp.allclose(y, y_ref, atol=1e-4, rtol=1e-4), "mismatch vs reference"

    print("KERNEL_OK")
</pallas_src>

<mosaic_0001>
module attributes {stable_mosaic.version = 11 : i64} {
  func.func @_linear_kernel_f32(%arg0: i32, %arg1: i32, %arg2: i32, %arg3: memref<8x128xf32, #tpu.memory_space<vmem>>, %arg4: memref<128x128xf32, #tpu.memory_space<vmem>>, %arg5: memref<1x128xf32, #tpu.memory_space<vmem>>, %arg6: memref<8x128xf32, #tpu.memory_space<vmem>>) attributes {dimension_semantics = [#tpu.dimension_semantics<parallel>, #tpu.dimension_semantics<parallel>, #tpu.dimension_semantics<arbitrary>], iteration_bounds = array<i64: 1, 1, 1>, scalar_prefetch = 0 : i64, scratch_operands = 0 : i64, tpu.core_type = #tpu.core_type<tc>, window_params = [{transform_indices = @transform_0, window_bounds = array<i64: 8, 128>}, {transform_indices = @transform_1, window_bounds = array<i64: 128, 128>}, {transform_indices = @transform_2, window_bounds = array<i64: 1, 128>}, {transform_indices = @transform_3, window_bounds = array<i64: 8, 128>}]} {
    %c0_i32 = arith.constant 0 : i32
    %0 = arith.cmpi eq, %arg2, %c0_i32 : i32
    %1 = arith.extui %0 : i1 to i32
    %c0_i32_0 = arith.constant 0 : i32
    %2 = arith.cmpi ne, %1, %c0_i32_0 : i32
    scf.if %2 {
      %c0_8 = arith.constant 0 : index
      %c0_9 = arith.constant 0 : index
      %9 = vector.load %arg5[%c0_8, %c0_9] : memref<1x128xf32, #tpu.memory_space<vmem>>, vector<1x128xf32>
      %10 = vector.shape_cast %9 : vector<1x128xf32> to vector<1x128xf32>
      %11 = vector.broadcast %10 : vector<1x128xf32> to vector<8x128xf32>
      %c0_10 = arith.constant 0 : index
      %c0_11 = arith.constant 0 : index
      %12 = vector.load %arg6[%c0_10, %c0_11] : memref<8x128xf32, #tpu.memory_space<vmem>>, vector<8x128xf32>
      tpu.vector_store %arg6[%c0_10, %c0_11], %11 {strides = array<i32>} : memref<8x128xf32, #tpu.memory_space<vmem>>, vector<8x128xf32>,
    } else {
    }
    %c0 = arith.constant 0 : index
    %c0_1 = arith.constant 0 : index
    %3 = vector.load %arg6[%c0, %c0_1] : memref<8x128xf32, #tpu.memory_space<vmem>>, vector<8x128xf32>
    %c0_2 = arith.constant 0 : index
    %c0_3 = arith.constant 0 : index
    %4 = vector.load %arg3[%c0_2, %c0_3] : memref<8x128xf32, #tpu.memory_space<vmem>>, vector<8x128xf32>
    %c0_4 = arith.constant 0 : index
    %c0_5 = arith.constant 0 : index
    %5 = vector.load %arg4[%c0_4, %c0_5] : memref<128x128xf32, #tpu.memory_space<vmem>>, vector<128x128xf32>
    %cst = arith.constant dense<0.000000e+00> : vector<8x128xf32>
    %6 = tpu.matmul %4, %5, %cst {dimension_numbers = #tpu.dot_dimension_numbers<[1], [0], [0], [1], [0, 0, 1, 1], [], []>} : vector<8x128xf32>, vector<128x128xf32>, vector<8x128xf32> -> vector<8x128xf32>
    %7 = arith.addf %3, %6 : vector<8x128xf32>
    %c0_6 = arith.constant 0 : index
    %c0_7 = arith.constant 0 : index
    %8 = vector.load %arg6[%c0_6, %c0_7] : memref<8x128xf32, #tpu.memory_space<vmem>>, vector<8x128xf32>
    tpu.vector_store %arg6[%c0_6, %c0_7], %7 {strides = array<i32>} : memref<8x128xf32, #tpu.memory_space<vmem>>, vector<8x128xf32>,
    return
  }
  func.func @transform_0(%arg0: i32, %arg1: i32, %arg2: i32) -> (i32, i32) {
    %c0_i32 = arith.constant 0 : i32
    return %arg0, %arg2 : i32, i32
  }
  func.func @transform_1(%arg0: i32, %arg1: i32, %arg2: i32) -> (i32, i32) {
    %c0_i32 = arith.constant 0 : i32
    return %arg2, %arg1 : i32, i32
  }
  func.func @transform_2(%arg0: i32, %arg1: i32, %arg2: i32) -> (i32, i32) {
    %c0_i32 = arith.constant 0 : i32
    %c0_i32_0 = arith.constant 0 : i32
    return %c0_i32, %arg1 : i32, i32
  }
  func.func @transform_3(%arg0: i32, %arg1: i32, %arg2: i32) -> (i32, i32) {
    %c0_i32 = arith.constant 0 : i32
    return %arg0, %arg1 : i32, i32
  }
}

</mosaic_0001>

<llo_original>
// kernel: _linear_pallas.1
$region0: #{_linear_pallas.1}
  #allocation0 [shape = 'u32[]', space=smem, size = 0x4, offset = 0x4, fixed_abs, tag = 'smem constant byte address 0x4 - core index']
  #allocation1 [shape = 'u32[144,128]{1,0:T(1,128)}', space=vmem, size = 0x12000, scoped, tag = 'internal scratch']
  %s0 = inlined_call_operand.vmem [shape: f32[8,128], index: 0, kind: input, shape index: {}]
  %s1 = inlined_call_operand.hbm [shape: f32[128,128], index: 1, kind: input, shape index: {}]
  %s2 = inlined_call_operand.vmem [shape: f32[1,128], index: 2, kind: input, shape index: {}]
  %s3 = inlined_call_operand.hbm [shape: f32[8,128], index: 3, kind: output, shape index: {}]
  %s4 = sld [smem:[#allocation0]]
  $region30: #{_linear_pallas.1} parent=0
    _
  %s6 = ssub.s32 1, %s4
  %s7 = scalar_select 0, %s6, %s4
  $region1: #{_linear_pallas.1} parent=0
    #allocation2 [shape = 'u8[65536]{0}', space=vmem, size = 0x10000, scoped, tag = 'input window, operand 1, single buffered']
    #allocation3 [shape = 's32[1]{0}', space=sflag, size = 0x4, scoped, tag = 'scoped memory for _linear_pallas.1']
    #allocation4 [shape = 's32[1]{0}', space=sflag, size = 0x4, scoped, tag = 'scoped memory for _linear_pallas.1']
    #allocation5 [shape = 'u8[4096]{0}', space=vmem, size = 0x1000, scoped, tag = 'output window, operand 0, single buffered']
    %8 = vsyncpa [#allocation3], 0
    %9 = vsyncpa [#allocation4], 0
    // Predicated region
    $region2: #{_linear_pallas.1} parent=1 // pred_check
      _
    $region3: #{_linear_pallas.1} parent=1 // pred_check_branch
      %11 = sbr.rel (0) target = $region5
    $region4: #{_linear_pallas.1} parent=1 // pred_region
      _
    $region5: #{_linear_pallas.1} parent=1 // pred_fallthru
      _
    // Predicated region
    $region6: #{_linear_pallas.1} parent=1 // pred_check
      _
    $region7: #{_linear_pallas.1} parent=1 // pred_check_branch
      %13 = sbr.rel (0) target = $region9
    $region8: #{_linear_pallas.1} parent=1 // pred_region
      %s15 = ssub.s32 2048, 2048
      %16 = vsyncadd [#allocation3], %s15
      %s17 = sshll.u32 [#allocation2], 4
      %s18 = int_to_ptr.vmem [resolvable:$true] %s17
      %23 = dma.hbm_to_vmem [thread:$0]  %s1, 2048, %s18, [#allocation3], 128, 128, 8
    $region9: #{_linear_pallas.1} parent=1 // pred_fallthru
      _
    // Predicated region
    $region10: #{_linear_pallas.1} parent=1 // pred_check
      _
    $region11: #{_linear_pallas.1} parent=1 // pred_check_branch
      %25 = sbr.rel (0) target = $region13
    $region12: #{_linear_pallas.1} parent=1 // pred_region
      _
    $region13: #{_linear_pallas.1} parent=1 // pred_fallthru
      _
    // Predicated region
    $region14: #{_linear_pallas.1} parent=1 // pred_check
      _
    $region15: #{_linear_pallas.1} parent=1 // pred_check_branch
      %27 = sbr.rel (0) target = $region17
    $region16: #{_linear_pallas.1} parent=1 // pred_region
      %28 = dma.done [#allocation3], 2048
    $region17: #{_linear_pallas.1} parent=1 // pred_fallthru
      _
    %p29 = scmp.eq.s32.totalorder 0, 0
    // Predicated region
    $region18: #{_linear_pallas.1} parent=1 // pred_check
      %p30 = pneg %p29
    $region19: #{_linear_pallas.1} parent=1 // pred_check_branch
      %32 = sbr.rel (%p30) target = $region21
    $region20: #{_linear_pallas.1} parent=1 // pred_region
      %v33 = vld [vmem:[%s2] sm:$0x1]
      %v35 = vlaneseq
      %v36 = vshrl.u32 %v35, 7
      %v37 = vsub.s32 0, %v36
      %v38 = vrot.slane %v33, %v37
      %40 = vst [vmem:[#allocation5] sm:$0xff] %v38
    $region21: #{_linear_pallas.1} parent=1 // pred_fallthru
      _
    %v41 = vld [vmem:[#allocation5] sm:$0xff]
    %v42 = vld [vmem:[%s0] sm:$0xff]
    %v43 = vld [vmem:[#allocation2] sm:$0xff]
    %v44 = vld [vmem:[#allocation2 + $0x8] sm:$0xff]
    %v45 = vld [vmem:[#allocation2 + $0x10] sm:$0xff]
    %v46 = vld [vmem:[#allocation2 + $0x18] sm:$0xff]
    %v47 = vld [vmem:[#allocation2 + $0x20] sm:$0xff]
    %v48 = vld [vmem:[#allocation2 + $0x28] sm:$0xff]
    %v49 = vld [vmem:[#allocation2 + $0x30] sm:$0xff]
    %v50 = vld [vmem:[#allocation2 + $0x38] sm:$0xff]
    %v51 = vld [vmem:[#allocation2 + $0x40] sm:$0xff]
    %v52 = vld [vmem:[#allocation2 + $0x48] sm:$0xff]
    %v53 = vld [vmem:[#allocation2 + $0x50] sm:$0xff]
    %v54 = vld [vmem:[#allocation2 + $0x58] sm:$0xff]
    %v55 = vld [vmem:[#allocation2 + $0x60] sm:$0xff]
    %v56 = vld [vmem:[#allocation2 + $0x68] sm:$0xff]
    %v57 = vld [vmem:[#allocation2 + $0x70] sm:$0xff]
    %v58 = vld [vmem:[#allocation2 + $0x78] sm:$0xff]
    %59 = vmatprep.subr.mxu0 0.0
    %60 = vmatpush1.msra.mxu0 %v58
    %61 = vmatprep.subr.mxu0 0.0
    %62 = vmatpush1.msra.mxu0 %v57
    %63 = vmatprep.subr.mxu0 0.0
    %64 = vmatpush1.msra.mxu0 %v56
    %65 = vmatprep.subr.mxu0 0.0
    %66 = vmatpush1.msra.mxu0 %v55
    %67 = vmatprep.subr.mxu0 0.0
    %68 = vmatpush1.msra.mxu0 %v54
    %69 = vmatprep.subr.mxu0 0.0
    %70 = vmatpush1.msra.mxu0 %v53
    %71 = vmatprep.subr.mxu0 0.0
    %72 = vmatpush1.msra.mxu0 %v52
    %73 = vmatprep.subr.mxu0 0.0
    %74 = vmatpush1.msra.mxu0 %v51
    %75 = vmatprep.subr.mxu0 0.0
    %76 = vmatpush1.msra.mxu0 %v50
    %77 = vmatprep.subr.mxu0 0.0
    %78 = vmatpush1.msra.mxu0 %v49
    %79 = vmatprep.subr.mxu0 0.0
    %80 = vmatpush1.msra.mxu0 %v48
    %81 = vmatprep.subr.mxu0 0.0
    %82 = vmatpush1.msra.mxu0 %v47
    %83 = vmatprep.subr.mxu0 0.0
    %84 = vmatpush1.msra.mxu0 %v46
    %85 = vmatprep.subr.mxu0 0.0
    %86 = vmatpush1.msra.mxu0 %v45
    %87 = vmatprep.subr.mxu0 0.0
    %88 = vmatpush1.msra.mxu0 %v44
    %89 = vmatprep.subr.mxu0 0.0
    %90 = vmatpush1.msra.mxu0 %v43
    %91 = vmatprep.subr.mxu0 0.0
    %92 = vmatpush2.msra.mxu0 0.0
    %93 = vmatprep.subr.mxu0 0.0
    %94 = vmatpush2.msra.mxu0 0.0
    %95 = vmatprep.subr.mxu0 0.0
    %96 = vmatpush2.msra.mxu0 0.0
    %97 = vmatprep.subr.mxu0 0.0
    %98 = vmatpush2.msra.mxu0 0.0
    %99 = vmatprep.subr.mxu0 0.0
    %100 = vmatpush2.msra.mxu0 0.0
    %101 = vmatprep.subr.mxu0 0.0
    %102 = vmatpush2.msra.mxu0 0.0
    %103 = vmatprep.subr.mxu0 0.0
    %104 = vmatpush2.msra.mxu0 0.0
    %105 = vmatprep.subr.mxu0 0.0
    %106 = vmatpush2.msra.mxu0 0.0
    %107 = vmatprep.subr.mxu0 0.0
    %108 = vmatpush2.msra.mxu0 0.0
    %109 = vmatprep.subr.mxu0 0.0
    %110 = vmatpush2.msra.mxu0 0.0
    %111 = vmatprep.subr.mxu0 0.0
    %112 = vmatpush2.msra.mxu0 0.0
    %113 = vmatprep.subr.mxu0 0.0
    %114 = vmatpush2.msra.mxu0 0.0
    %115 = vmatprep.subr.mxu0 0.0
    %116 = vmatpush2.msra.mxu0 0.0
    %117 = vmatprep.subr.mxu0 0.0
    %118 = vmatpush2.msra.mxu0 0.0
    %119 = vmatprep.subr.mxu0 0.0
    %120 = vmatpush2.msra.mxu0 0.0
    %121 = vmatprep.subr.mxu0 0.0
    %122 = vmatpush2.msra.mxu0 0.0
    %123 = vmatprep.mubr.f32.mxu0 0.0
    %124 = vmatmul.mubr.f32.gmra.mxu0 %v42
    %v125 = vpop.f32.mrf.mxu0
    %v126 = vadd.f32 0.0, %v125
    %v127 = vpop.f32.mrf.mxu0
    %128 = vdwg.mxu0
    %v129 = vadd.f32 %v41, %v126
    %130 = vst [vmem:[#allocation5] sm:$0xff] %v129
    // Predicated region
    $region22: #{_linear_pallas.1} parent=1 // pred_check
      _
    $region23: #{_linear_pallas.1} parent=1 // pred_check_branch
      %132 = sbr.rel (0) target = $region25
    $region24: #{_linear_pallas.1} parent=1 // pred_region
      %s134 = ssub.s32 128, 128
      %135 = vsyncadd [#allocation4], %s134
      %s137 = sshll.u32 [#allocation5], 4
      %s138 = int_to_ptr.vmem [resolvable:$true] %s137
      %140 = dma.vmem_to_hbm [thread:$0]  %s138, 128, %s3, [#allocation4]
    $region25: #{_linear_pallas.1} parent=1 // pred_fallthru
      _
    // Predicated region
    $region26: #{_linear_pallas.1} parent=1 // pred_check
      _
    $region27: #{_linear_pallas.1} parent=1 // pred_check_branch
      %142 = sbr.rel (0) target = $region29
    $region28: #{_linear_pallas.1} parent=1 // pred_region
      %143 = dma.done [#allocation4], 128
    $region29: #{_linear_pallas.1} parent=1 // pred_fallthru
      _
    %144 = vsyncpa [#allocation3], 1
    %145 = vsyncpa [#allocation4], 1

</llo_original>
